<compile_context>
chip_gen: v6e
topology: v6e:2x2x1
jax: 0.10.0
libtpu: 0.0.40
codegen_flags: <defaults>
</compile_context>

<pallas_src>
import functools

import jax
import jax.numpy as jnp
from jax.experimental import pallas as pl
from jax.experimental.pallas import tpu as pltpu


def _round_up(n, m):
    return ((n + m - 1) // m) * m


def _default_compute_dtype():
    """bf16 hidden math on v6e/v7x (bf16 VALUs); f32 on v5e and anything else."""
    try:
        kind = jax.devices()[0].device_kind.lower()
    except Exception:
        return jnp.float32
    if "v6" in kind or "v7" in kind:
        return jnp.bfloat16
    return jnp.float32


def _plan_tiles(B, H, target_steps=8):
    """Pick (lane tile, strip, padded batch).

    Big lane tiles amortize the ~0.35 us per-grid-step pipeline overhead;
    aiming for >= target_steps grid steps keeps both v7x TensorCores fed
    (harmless on v5e/v6e, which have a single TC). VMEM is a non-issue: the
    double-buffered x^T tile is only 16*tb (f32) / 8*tb (bf16) bytes.
    """
    tb = _round_up(max((B + target_steps - 1) // target_steps, 1), 128)
    tb = max(1024, min(tb, 32768))
    tb = min(tb, _round_up(B, 128))        # never blow up tiny batches
    # Strip width: keep the per-strip (H, strip) hidden block within ~32 f32
    # vregs so it lives entirely in vregs (no VMEM store/reload of h, no spill).
    strip = 512
    while strip > 128 and H * strip > 32768:
        strip //= 2
    if tb <= strip:
        strip = tb
    else:
        tb = _round_up(tb, strip)
    Bp = _round_up(B, tb)
    return tb, strip, Bp


def _mlp_kernel(xT_ref, w1_ref, b1_ref, w2c_ref, b2_ref, o_ref, *, strip):
    # xT_ref:  (2, TB)  input transposed (compute dtype): batch on lanes
    # w1_ref:  (H, 2)   hidden weight (PyTorch (out, in) layout), compute dtype
    # b1_ref:  (H, 1)   hidden bias column, compute dtype
    # w2c_ref: (H, 1)   output weight column (w2.T), compute dtype
    # b2_ref:  (1, 1)   output bias (SMEM, f32)
    # o_ref:   (1, TB)  output tile (f32), batch on lanes
    w1 = w1_ref[...]                       # (H, 2)
    w10 = w1[:, 0:1]                       # (H, 1)
    w11 = w1[:, 1:2]                       # (H, 1)
    b1 = b1_ref[...]                       # (H, 1)
    w2c = w2c_ref[...]                     # (H, 1)
    b2 = b2_ref[0, 0]                      # scalar (f32)

    tb = o_ref.shape[-1]
    n_strips = tb // strip

    # Strip-mine the lane axis so the (H, TB) hidden activation never hits VMEM:
    # per strip, layer-1 FMA + ReLU + layer-2 multiply/sublane-reduce fuse in
    # vregs; the VALU is the only busy slot (reduce -> XLU, tanh -> EUP).
    @pl.loop(0, n_strips)
    def _(s):
        off = pl.multiple_of(s * strip, strip)
        x0 = xT_ref[0:1, pl.ds(off, strip)]                 # (1, strip)
        x1 = xT_ref[1:2, pl.ds(off, strip)]                 # (1, strip)
        # Layer 1: relu(W1 @ x^T + b1) as two broadcast FMAs (VPU, no MXU).
        h = jnp.maximum(w10 * x0 + w11 * x1 + b1, 0)        # (H, strip)
        # Layer 2: w2 . h via elementwise mul + sublane reduce; reduce in f32.
        y = jnp.sum((h * w2c).astype(jnp.float32), axis=0, keepdims=True) + b2
        # sigmoid(y) = 0.5*(tanh(0.5*y)+1): transcendental on the idle EUP slot.
        o_ref[0:1, pl.ds(off, strip)] = (
            0.5 * (jnp.tanh(0.5 * y) + 1.0)
        ).astype(o_ref.dtype)


def _mlp_pallas(xT, w1, b1, w2, b2, compute_dtype):
    """Core: xT is feature-major (2, B). Returns (1, B) float32."""
    in_f, B = xT.shape
    H = w1.shape[0]

    tb, strip, Bp = _plan_tiles(B, H)

    cd = compute_dtype
    xTp = xT.astype(cd)
    if Bp != B:
        xTp = jnp.zeros((in_f, Bp), cd).at[:, :B].set(xTp)
    w1_c = w1.astype(cd)                                  # (H, 2)
    b1_c = b1.reshape(H, 1).astype(cd)                    # (H, 1)
    w2_c = w2.reshape(H, 1).astype(cd)                    # (H, 1)  (= w2.T)
    b2_r = b2.reshape(1, 1).astype(jnp.float32)           # (1, 1) -> SMEM

    grid = (Bp // tb,)
    kernel = functools.partial(_mlp_kernel, strip=strip)

    out_T = pl.pallas_call(
        kernel,
        out_shape=jax.ShapeDtypeStruct((1, Bp), jnp.float32),
        grid_spec=pltpu.PrefetchScalarGridSpec(
            num_scalar_prefetch=0,
            grid=grid,
            in_specs=[
                pl.BlockSpec((in_f, tb), lambda i: (0, i)),     # x^T tile (lane-dense)
                pl.BlockSpec((H, in_f), lambda i: (0, 0)),      # W1 (resident)
                pl.BlockSpec((H, 1), lambda i: (0, 0)),         # b1 column
                pl.BlockSpec((H, 1), lambda i: (0, 0)),         # w2 column
                pl.BlockSpec(memory_space=pltpu.MemorySpace.SMEM),  # b2 scalar
            ],
            out_specs=pl.BlockSpec((1, tb), lambda i: (0, i)),  # lane-dense output
        ),
        compiler_params=pltpu.CompilerParams(
            # Parallel batch axis: on v7x (2 TCs/chip) the >= 2 grid steps we
            # aim for in _plan_tiles let both cores work; on v5e/v6e this is
            # just the pipeline loop. Default double-buffering is plenty: the
            # per-step DMA is tiny versus the VALU work, so no pl.Buffered(3).
            dimension_semantics=("parallel",),
        ),
    )(xTp, w1_c, b1_c, w2_c, b2_r)

    return out_T[:, :B]


@functools.partial(jax.jit, static_argnames=("compute_dtype",))
def mlp_forward(x, w1, b1, w2, b2, *, compute_dtype=None):
    """Module-compatible entry point: x is (B, 2) as in the PyTorch forward.

    x: (B, 2); w1: (n_hidden, 2); b1: (n_hidden,); w2: (1, n_hidden); b2: (1,).
    Returns (B, 1) float32.
    """
    if compute_dtype is None:
        compute_dtype = _default_compute_dtype()
    # TODO(synk): the (B,2)->(2,B) transpose is a separate XLA pass over x;
    # producers that can emit feature-major activations should call
    # mlp_forward_feature_major directly and skip it.
    out_T = _mlp_pallas(x.T, w1, b1, w2, b2, compute_dtype)   # (1, B)
    return out_T.T                                            # (B, 1)


@functools.partial(jax.jit, static_argnames=("compute_dtype",))
def mlp_forward_feature_major(xT, w1, b1, w2, b2, *, compute_dtype=None):
    """Fast path: xT is feature-major (2, B); returns (1, B) float32."""
    if compute_dtype is None:
        compute_dtype = _default_compute_dtype()
    return _mlp_pallas(xT, w1, b1, w2, b2, compute_dtype)


def mlp_reference(x, w1, b1, w2, b2):
    h = jnp.maximum(x @ w1.T + b1, 0.0)
    return jax.nn.sigmoid(h @ w2.T + b2)


if __name__ == "__main__":
    key = jax.random.PRNGKey(0)
    k_x, k_w1, k_b1, k_w2, k_b2 = jax.random.split(key, 5)

    batch = 8
    n_in = 2
    n_hidden = 32

    # Deterministic synthetic parameters (PyTorch Linear shapes: (out, in), (out,)).
    x = jax.random.normal(k_x, (batch, n_in), dtype=jnp.float32)
    w1 = jax.random.normal(k_w1, (n_hidden, n_in), dtype=jnp.float32) * 0.5
    b1 = jax.random.normal(k_b1, (n_hidden,), dtype=jnp.float32) * 0.1
    w2 = jax.random.normal(k_w2, (1, n_hidden), dtype=jnp.float32) * 0.5
    b2 = jax.random.normal(k_b2, (1,), dtype=jnp.float32) * 0.1

    out = jax.block_until_ready(mlp_forward(x, w1, b1, w2, b2))
    out_fm = jax.block_until_ready(
        mlp_forward_feature_major(x.T, w1, b1, w2, b2)
    )
    ref = mlp_reference(x, w1, b1, w2, b2)

    cd = _default_compute_dtype()
    if cd == jnp.bfloat16:
        atol, rtol = 3e-2, 0.0   # bf16 hidden activations on v6e/v7x
    else:
        atol, rtol = 1e-5, 1e-5  # full f32 path on v5e & others

    assert out.shape == (batch, 1), out.shape
    assert out_fm.shape == (1, batch), out_fm.shape
    assert jnp.allclose(out, ref, atol=atol, rtol=rtol), (out, ref)
    assert jnp.allclose(out_fm.T, ref, atol=atol, rtol=rtol), (out_fm, ref)

    print("KERNEL_OK")
</pallas_src>

<mosaic_0001>
module attributes {stable_mosaic.version = 11 : i64} {
  func.func @_mlp_kernel(%arg0: i32, %arg1: memref<2x128xf32, #tpu.memory_space<vmem>>, %arg2: memref<32x2xf32, #tpu.memory_space<vmem>>, %arg3: memref<32x1xf32, #tpu.memory_space<vmem>>, %arg4: memref<32x1xf32, #tpu.memory_space<vmem>>, %arg5: memref<1x1xf32, #tpu.memory_space<smem>>, %arg6: memref<1x128xf32, #tpu.memory_space<vmem>>) attributes {dimension_semantics = [#tpu.dimension_semantics<parallel>], iteration_bounds = array<i64: 1>, scalar_prefetch = 0 : i64, scratch_operands = 0 : i64, tpu.core_type = #tpu.core_type<tc>, window_params = [{transform_indices = @transform_0, window_bounds = array<i64: 2, 128>}, {pipeline_mode = #tpu.pipeline_mode<synchronous>, transform_indices = @transform_1, window_bounds = array<i64: 32, 2>}, {pipeline_mode = #tpu.pipeline_mode<synchronous>, transform_indices = @transform_2, window_bounds = array<i64: 32, 1>}, {pipeline_mode = #tpu.pipeline_mode<synchronous>, transform_indices = @transform_3, window_bounds = array<i64: 32, 1>}, {transform_indices = @transform_4, window_bounds = array<i64: 1, 1>}, {transform_indices = @transform_5, window_bounds = array<i64: 1, 128>}]} {
    %c0 = arith.constant 0 : index
    %c0_0 = arith.constant 0 : index
    %0 = vector.load %arg2[%c0, %c0_0] : memref<32x2xf32, #tpu.memory_space<vmem>>, vector<32x2xf32>
    %1 = vector.extract_strided_slice %0 {offsets = [0, 0], sizes = [32, 1], strides = [1, 1]} : vector<32x2xf32> to vector<32x1xf32>
    %2 = vector.extract_strided_slice %0 {offsets = [0, 1], sizes = [32, 1], strides = [1, 1]} : vector<32x2xf32> to vector<32x1xf32>
    %c0_1 = arith.constant 0 : index
    %c0_2 = arith.constant 0 : index
    %3 = vector.load %arg3[%c0_1, %c0_2] : memref<32x1xf32, #tpu.memory_space<vmem>>, vector<32x1xf32>
    %c0_3 = arith.constant 0 : index
    %c0_4 = arith.constant 0 : index
    %4 = vector.load %arg4[%c0_3, %c0_4] : memref<32x1xf32, #tpu.memory_space<vmem>>, vector<32x1xf32>
    %c0_5 = arith.constant 0 : index
    %c0_6 = arith.constant 0 : index
    %5 = memref.load %arg5[%c0_5, %c0_6] : memref<1x1xf32, #tpu.memory_space<smem>>
    %c0_i32 = arith.constant 0 : i32
    %c1_i32 = arith.constant 1 : i32
    %6 = arith.muli %c0_i32, %c1_i32 : i32
    %c0_i32_7 = arith.constant 0 : i32
    %7 = arith.addi %c0_i32_7, %6 : i32
    %c128_i32 = arith.constant 128 : i32
    %8 = arith.muli %7, %c128_i32 : i32
    %9 = tpu.assume_multiple %8, 128 : i32
    %c0_8 = arith.constant 0 : index
    %10 = arith.index_cast %9 : i32 to index
    %11 = vector.load %arg1[%c0_8, %10] : memref<2x128xf32, #tpu.memory_space<vmem>>, vector<1x128xf32>
    %c1 = arith.constant 1 : index
    %12 = arith.index_cast %9 : i32 to index
    %13 = vector.load %arg1[%c1, %12] : memref<2x128xf32, #tpu.memory_space<vmem>>, vector<1x128xf32>
    %14 = vector.broadcast %1 : vector<32x1xf32> to vector<32x128xf32>
    %15 = vector.broadcast %11 : vector<1x128xf32> to vector<32x128xf32>
    %16 = arith.mulf %14, %15 : vector<32x128xf32>
    %17 = vector.broadcast %2 : vector<32x1xf32> to vector<32x128xf32>
    %18 = vector.broadcast %13 : vector<1x128xf32> to vector<32x128xf32>
    %19 = arith.mulf %17, %18 : vector<32x128xf32>
    %20 = arith.addf %16, %19 : vector<32x128xf32>
    %21 = vector.broadcast %3 : vector<32x1xf32> to vector<32x128xf32>
    %22 = arith.addf %20, %21 : vector<32x128xf32>
    %cst = arith.constant 0.000000e+00 : f32
    %23 = vector.broadcast %cst : f32 to vector<32x128xf32>
    %24 = arith.maximumf %22, %23 : vector<32x128xf32>
    %25 = vector.broadcast %4 : vector<32x1xf32> to vector<32x128xf32>
    %26 = arith.mulf %24, %25 : vector<32x128xf32>
    %cst_9 = arith.constant dense<0.000000e+00> : vector<128xf32>
    %27 = vector.multi_reduction <add>, %26, %cst_9 [0] : vector<32x128xf32> to vector<128xf32>
    %28 = vector.shape_cast %27 : vector<128xf32> to vector<1x128xf32>
    %29 = vector.broadcast %5 : f32 to vector<1x128xf32>
    %30 = arith.addf %28, %29 : vector<1x128xf32>
    %cst_10 = arith.constant 5.000000e-01 : f32
    %31 = vector.broadcast %cst_10 : f32 to vector<1x128xf32>
    %32 = arith.mulf %31, %30 : vector<1x128xf32>
    %33 = math.tanh %32 : vector<1x128xf32>
    %cst_11 = arith.constant 1.000000e+00 : f32
    %34 = vector.broadcast %cst_11 : f32 to vector<1x128xf32>
    %35 = arith.addf %33, %34 : vector<1x128xf32>
    %cst_12 = arith.constant 5.000000e-01 : f32
    %36 = vector.broadcast %cst_12 : f32 to vector<1x128xf32>
    %37 = arith.mulf %36, %35 : vector<1x128xf32>
    %c0_13 = arith.constant 0 : index
    %38 = arith.index_cast %9 : i32 to index
    %39 = vector.load %arg6[%c0_13, %38] : memref<1x128xf32, #tpu.memory_space<vmem>>, vector<1x128xf32>
    tpu.vector_store %arg6[%c0_13, %38], %37 {strides = array<i32>} : memref<1x128xf32, #tpu.memory_space<vmem>>, vector<1x128xf32>,
    %c1_i32_14 = arith.constant 1 : i32
    return
  }
  func.func @transform_0(%arg0: i32) -> (i32, i32) {
    %c0_i32 = arith.constant 0 : i32
    %c0_i32_0 = arith.constant 0 : i32
    return %c0_i32, %arg0 : i32, i32
  }
  func.func @transform_1(%arg0: i32) -> (i32, i32) {
    %c0_i32 = arith.constant 0 : i32
    %c0_i32_0 = arith.constant 0 : i32
    %c0_i32_1 = arith.constant 0 : i32
    return %c0_i32, %c0_i32_0 : i32, i32
  }
  func.func @transform_2(%arg0: i32) -> (i32, i32) {
    %c0_i32 = arith.constant 0 : i32
    %c0_i32_0 = arith.constant 0 : i32
    %c0_i32_1 = arith.constant 0 : i32
    return %c0_i32, %c0_i32_0 : i32, i32
  }
  func.func @transform_3(%arg0: i32) -> (i32, i32) {
    %c0_i32 = arith.constant 0 : i32
    %c0_i32_0 = arith.constant 0 : i32
    %c0_i32_1 = arith.constant 0 : i32
    return %c0_i32, %c0_i32_0 : i32, i32
  }
  func.func @transform_4(%arg0: i32) -> (i32, i32) {
    %c0_i32 = arith.constant 0 : i32
    %c0_i32_0 = arith.constant 0 : i32
    %c0_i32_1 = arith.constant 0 : i32
    return %c0_i32, %c0_i32_0 : i32, i32
  }
  func.func @transform_5(%arg0: i32) -> (i32, i32) {
    %c0_i32 = arith.constant 0 : i32
    %c0_i32_0 = arith.constant 0 : i32
    return %c0_i32, %arg0 : i32, i32
  }
}

</mosaic_0001>

<llo_original>
// kernel: mlp_forward.1
$region0: #{mlp_forward.1}
  #allocation0 [shape = 'u32[]', space=smem, size = 0x4, offset = 0x4, fixed_abs, tag = 'smem constant byte address 0x4 - core index']
  #allocation1 [shape = 'u32[144,128]{1,0:T(1,128)}', space=vmem, size = 0x12000, scoped, tag = 'internal scratch']
  #allocation2 [shape = 'f32[1,1]{1,0:T(1,128)S(6)}', space=smem, size = 0x200, scoped, tag = 'scoped memory for mlp_forward.1']
  %s0 = inlined_call_operand.vmem [shape: f32[2,128], index: 0, kind: input, shape index: {}]
  %s1 = inlined_call_operand.vmem [shape: f32[32,2], index: 1, kind: input, shape index: {}]
  %s2 = inlined_call_operand.vmem [shape: f32[32,1], index: 2, kind: input, shape index: {}]
  %s3 = inlined_call_operand.vmem [shape: f32[32,1], index: 3, kind: input, shape index: {}]
  %s4 = inlined_call_operand.<no memory space> [shape: f32[1,1], index: 4, kind: input, shape index: {}]
  %s5 = inlined_call_operand.vmem [shape: f32[1,128], index: 5, kind: output, shape index: {}]
  %s6 = sld [smem:[#allocation0]]
  $region30: #{mlp_forward.1} parent=0
    _
  %s8 = ssub.s32 1, %s6
  %s9 = scalar_select 0, %s8, %s6
  %10 = sst [smem:[#allocation2]] %s4
  // Predicated region
  $region2: #{mlp_forward.1} parent=0 // pred_check
    _
  $region3: #{mlp_forward.1} parent=0 // pred_check_branch
    %12 = sbr.rel (0) target = $region5
  $region4: #{mlp_forward.1} parent=0 // pred_region
    _
  $region5: #{mlp_forward.1} parent=0 // pred_fallthru
    _
  // Predicated region
  $region6: #{mlp_forward.1} parent=0 // pred_check
    _
  $region7: #{mlp_forward.1} parent=0 // pred_check_branch
    %14 = sbr.rel (0) target = $region9
  $region8: #{mlp_forward.1} parent=0 // pred_region
    _
  $region9: #{mlp_forward.1} parent=0 // pred_fallthru
    _
  // Predicated region
  $region10: #{mlp_forward.1} parent=0 // pred_check
    _
  $region11: #{mlp_forward.1} parent=0 // pred_check_branch
    %16 = sbr.rel (0) target = $region13
  $region12: #{mlp_forward.1} parent=0 // pred_region
    _
  $region13: #{mlp_forward.1} parent=0 // pred_fallthru
    _
  // Predicated region
  $region14: #{mlp_forward.1} parent=0 // pred_check
    _
  $region15: #{mlp_forward.1} parent=0 // pred_check_branch
    %18 = sbr.rel (0) target = $region17
  $region16: #{mlp_forward.1} parent=0 // pred_region
    _
  $region17: #{mlp_forward.1} parent=0 // pred_fallthru
    _
  // Predicated region
  $region18: #{mlp_forward.1} parent=0 // pred_check
    _
  $region19: #{mlp_forward.1} parent=0 // pred_check_branch
    %20 = sbr.rel (0) target = $region21
  $region20: #{mlp_forward.1} parent=0 // pred_region
    _
  $region21: #{mlp_forward.1} parent=0 // pred_fallthru
    _
  %v21 = vld [vmem:[%s1] sm:$0xff]
  %v22 = vld [vmem:[%s1 + $0x8] sm:$0xff]
  %v23 = vld [vmem:[%s1 + $0x10] sm:$0xff]
  %v24 = vld [vmem:[%s1 + $0x18] sm:$0xff]
  %v25 = vld [vmem:[%s2] sm:$0xff]
  %v26 = vld [vmem:[%s2 + $0x8] sm:$0xff]
  %v27 = vld [vmem:[%s2 + $0x10] sm:$0xff]
  %v28 = vld [vmem:[%s2 + $0x18] sm:$0xff]
  %v29 = vld [vmem:[%s3] sm:$0xff]
  %v30 = vld [vmem:[%s3 + $0x8] sm:$0xff]
  %v31 = vld [vmem:[%s3 + $0x10] sm:$0xff]
  %v32 = vld [vmem:[%s3 + $0x18] sm:$0xff]
  %s33 = sld [smem:[#allocation2]]
  %v34 = vld [vmem:[%s0] sm:$0x1]
  %v35 = vld [vmem:[%s0 + $0x1] sm:$0x1]
  %37 = vset.pattern.permute.xlu0 0
  %38 = vperm.xlu0 %37, %v21
  %v39 = vpop.permute.xlu0 %38
  %42 = vset.pattern.permute.xlu0 0
  %43 = vperm.xlu0 %42, %v22
  %v44 = vpop.permute.xlu0 %43
  %47 = vset.pattern.permute.xlu0 0
  %48 = vperm.xlu0 %47, %v23
  %v49 = vpop.permute.xlu0 %48
  %52 = vset.pattern.permute.xlu0 0
  %53 = vperm.xlu0 %52, %v24
  %v54 = vpop.permute.xlu0 %53
  %v56 = vlaneseq
  %v57 = vshrl.u32 %v56, 7
  %v58 = vsub.s32 0, %v57
  %v59 = vrot.slane %v34, %v58
  %v60 = vmul.f32 %v39, %v59
  %v61 = vmul.f32 %v44, %v59
  %v62 = vmul.f32 %v49, %v59
  %v63 = vmul.f32 %v54, %v59
  %64 = vset.pattern.permute.xlu0 1
  %65 = vperm.xlu0 %64, %v21
  %v66 = vpop.permute.xlu0 %65
  %68 = vset.pattern.permute.xlu0 1
  %69 = vperm.xlu0 %68, %v22
  %v70 = vpop.permute.xlu0 %69
  %72 = vset.pattern.permute.xlu0 1
  %73 = vperm.xlu0 %72, %v23
  %v74 = vpop.permute.xlu0 %73
  %76 = vset.pattern.permute.xlu0 1
  %77 = vperm.xlu0 %76, %v24
  %v78 = vpop.permute.xlu0 %77
  %v80 = vlaneseq
  %v81 = vshrl.u32 %v80, 7
  %v82 = vsub.s32 0, %v81
  %v83 = vrot.slane %v35, %v82
  %v84 = vmul.f32 %v66, %v83
  %v85 = vmul.f32 %v70, %v83
  %v86 = vmul.f32 %v74, %v83
  %v87 = vmul.f32 %v78, %v83
  %v88 = vadd.f32 %v60, %v84
  %v89 = vadd.f32 %v61, %v85
  %v90 = vadd.f32 %v62, %v86
  %v91 = vadd.f32 %v63, %v87
  %93 = vset.pattern.permute.xlu0 0
  %94 = vperm.xlu0 %93, %v25
  %v95 = vpop.permute.xlu0 %94
  %98 = vset.pattern.permute.xlu0 0
  %99 = vperm.xlu0 %98, %v26
  %v100 = vpop.permute.xlu0 %99
  %103 = vset.pattern.permute.xlu0 0
  %104 = vperm.xlu0 %103, %v27
  %v105 = vpop.permute.xlu0 %104
  %108 = vset.pattern.permute.xlu0 0
  %109 = vperm.xlu0 %108, %v28
  %v110 = vpop.permute.xlu0 %109
  %v112 = vadd.f32 %v88, %v95
  %v113 = vadd.f32 %v89, %v100
  %v114 = vadd.f32 %v90, %v105
  %v115 = vadd.f32 %v91, %v110
  %v116 = vmax.f32 %v112, 0.0
  %v117 = vmax.f32 %v113, 0.0
  %v118 = vmax.f32 %v114, 0.0
  %v119 = vmax.f32 %v115, 0.0
  %121 = vset.pattern.permute.xlu0 0
  %122 = vperm.xlu0 %121, %v29
  %v123 = vpop.permute.xlu0 %122
  %126 = vset.pattern.permute.xlu0 0
  %127 = vperm.xlu0 %126, %v30
  %v128 = vpop.permute.xlu0 %127
  %131 = vset.pattern.permute.xlu0 0
  %132 = vperm.xlu0 %131, %v31
  %v133 = vpop.permute.xlu0 %132
  %136 = vset.pattern.permute.xlu0 0
  %137 = vperm.xlu0 %136, %v32
  %v138 = vpop.permute.xlu0 %137
  %v140 = vmul.f32 %v116, %v123
  %v141 = vmul.f32 %v117, %v128
  %v142 = vmul.f32 %v118, %v133
  %v143 = vmul.f32 %v119, %v138
  %v144 = vadd.f32 %v140, %v141
  %v145 = vadd.f32 %v144, %v142
  %v146 = vadd.f32 %v145, %v143
  %v147 = vrot.slane %v146, 4
  %v148 = vadd.f32 %v146, %v147
  %v149 = vrot.slane %v148, 2
  %v150 = vadd.f32 %v148, %v149
  %v151 = vrot.slane %v150, 1
  %v152 = vadd.f32 %v150, %v151
  %v153 = vstv %s33
  %v154 = vadd.f32 %v152, %v153
  %v155 = vmul.f32 %v154, 0.5
  %v156 = vtanh.pop %v155
  %v157 = vadd.f32 %v156, 1.0
  %v158 = vmul.f32 %v157, 0.5
  %159 = vst [vmem:[%s5] sm:$0x1] %v158
  // Predicated region
  $region22: #{mlp_forward.1} parent=0 // pred_check
    _
  $region23: #{mlp_forward.1} parent=0 // pred_check_branch
    %161 = sbr.rel (0) target = $region25
  $region24: #{mlp_forward.1} parent=0 // pred_region
    _
  $region25: #{mlp_forward.1} parent=0 // pred_fallthru
    _
  // Predicated region
  $region26: #{mlp_forward.1} parent=0 // pred_check
    _
  $region27: #{mlp_forward.1} parent=0 // pred_check_branch
    %163 = sbr.rel (0) target = $region29
  $region28: #{mlp_forward.1} parent=0 // pred_region
    _
  $region29: #{mlp_forward.1} parent=0 // pred_fallthru
    _

</llo_original>
